<compile_context>
chip_gen: v7x
topology: tpu7x:2x2x1
jax: 0.10.0
libtpu: 0.0.40
codegen_flags: <defaults>
</compile_context>

<pallas_src>
import functools

import jax
import jax.numpy as jnp
import numpy as np
from jax.experimental import pallas as pl
from jax.experimental.pallas import tpu as pltpu


def _meanpool_kernel(enc_ref, out_ref, acc_ref, *, num_rows, inv_seq, ts, needs_mask):
    """Streamed sum-reduce over the seq axis into an (8, tf) sublane-aligned scratch."""
    s = pl.program_id(1)                    # reduction (seq-chunk) axis, last in the grid
    last = pl.num_programs(1) - 1

    @pl.when(s == 0)
    def _():
        acc_ref[...] = jnp.zeros_like(acc_ref)

    def _accumulate(x):
        # x: (ts, tf) f32
        if ts >= 8 and ts % 8 == 0:
            # Sublane-aligned partial fold: pure full-vreg VALU adds, no per-chunk XLU.
            acc_ref[...] += jnp.sum(x.reshape(ts // 8, 8, x.shape[-1]), axis=0)
        else:
            # Tiny / unaligned chunk (only occurs for small full-extent blocks).
            acc_ref[0:1, :] += jnp.sum(x, axis=0, keepdims=True)

    x = enc_ref[...].astype(jnp.float32)

    if needs_mask:
        # Only the (padded) tail chunk carries garbage rows; all other chunks unmasked.
        @pl.when(s != last)
        def _():
            _accumulate(x)

        @pl.when(s == last)
        def _():
            row = jax.lax.broadcasted_iota(jnp.int32, (ts, 1), 0) + s * ts
            _accumulate(jnp.where(row < num_rows, x, 0.0))
    else:
        _accumulate(x)

    @pl.when(s == last)
    def _():
        # Single cross-sublane fold + 1/seq_len scale + one lane-dense store.
        total = jnp.sum(acc_ref[...], axis=0, keepdims=True)
        out_ref[...] = total * jnp.float32(inv_seq)


def _chip_profile():
    """(num_tensorcores, target input-block bytes, vmem_limit_bytes or None)."""
    kind = ""
    try:
        kind = jax.devices()[0].device_kind.lower()
    except Exception:
        pass
    if "7" in kind:
        # v7x: 2 TensorCores share ~3.2 TB/s HBM; 64 MiB physical / 32 MiB scoped VMEM per TC.
        return 2, 4 << 20, None
    if "v6" in kind or "6e" in kind or "6 lite" in kind:
        # v6e: 1 TC, 128 MiB physical VMEM -> bigger blocks + raised scoped limit.
        return 1, 8 << 20, 64 << 20
    # v5e and unknown chips: conservative (v5e default scoped VMEM is only 16 MiB).
    return 1, 4 << 20, None


def _choose_tiles(num_rows, F, itemsize, num_cores, target_block_bytes):
    """Pick (seq_tile, feature_tile) honoring the (8, 128) constraint and VMEM budget."""
    pack = max(8, 32 // itemsize)           # native sublane packing: f32->8, bf16->16, i8->32

    # ---- feature tile -----------------------------------------------------
    nf = 1
    # Split features across TensorCores only on multi-TC chips (v7x), and only when
    # each split row remains a large contiguous burst (>= 512 B).
    if (num_cores > 1 and F % (128 * num_cores) == 0
            and (F // num_cores) * itemsize >= 512):
        nf = num_cores
    # Cap per-block VMEM for very wide feature dims: even a pack-row block x 2 buffers
    # must stay well under the smallest scoped-VMEM budget (v7x: 32 MiB default).
    max_min_block_bytes = 24 << 20
    while ((F // nf) * pack * itemsize * 2 > max_min_block_bytes
           and F % (nf * 2) == 0 and (F // (nf * 2)) % 128 == 0):
        nf *= 2
    tf = F // nf

    # ---- seq tile ---------------------------------------------------------
    target_rows = max(1, target_block_bytes // (tf * itemsize))
    if target_rows >= num_rows:
        ts = num_rows                        # single full-extent chunk: always legal, no mask
    else:
        # Prefer the largest divisor of num_rows that is a pack multiple <= target:
        # eliminates the masked tail and avoids DMAing dead padded rows.
        best = 0
        d = pack
        while d <= target_rows:
            if num_rows % d == 0:
                best = d
            d += pack
        ts = best if best else max(pack, (target_rows // pack) * pack)
    return ts, tf


def mean_pool(hidden, encoder_outputs, *, target_block_bytes=None):
    """Pallas implementation of MeanPool.forward(hidden, encoder_outputs)."""
    S, B, H = encoder_outputs.shape
    Bh = hidden.shape[0]
    BH = B * H
    itemsize = jnp.dtype(encoder_outputs.dtype).itemsize

    num_cores, default_block_bytes, vmem_limit = _chip_profile()
    if target_block_bytes is None:
        target_block_bytes = default_block_bytes

    # Small-BH path: fold k seq rows into the lane dim so the last dim is >= 128
    # (lane-dense vregs / unmasked stores); the k partial means are folded below.
    k = 1
    if BH < 128:
        for cand in range(2, S + 1):
            if S % cand == 0 and cand * BH >= 128:
                k = cand
                break
    num_rows = S // k
    F = k * BH

    # Lane-dense 2-D slab (contiguous reshape, free in XLA).
    slab = encoder_outputs.reshape(num_rows, F)

    ts, tf = _choose_tiles(num_rows, F, itemsize, num_cores, target_block_bytes)
    nf = F // tf
    ns = pl.cdiv(num_rows, ts)
    needs_mask = (num_rows % ts) != 0

    kernel = functools.partial(
        _meanpool_kernel,
        num_rows=num_rows,
        inv_seq=1.0 / S,
        ts=ts,
        needs_mask=needs_mask,
    )

    pooled_f32 = pl.pallas_call(
        kernel,
        out_shape=jax.ShapeDtypeStruct((1, F), jnp.float32),
        grid_spec=pltpu.PrefetchScalarGridSpec(
            num_scalar_prefetch=0,
            grid=(nf, ns),  # features (parallel) first, seq reduction (arbitrary) last
            in_specs=[pl.BlockSpec((ts, tf), lambda f, s: (s, f))],
            out_specs=pl.BlockSpec((1, tf), lambda f, s: (0, f)),
            scratch_shapes=[pltpu.VMEM((8, tf), jnp.float32)],
        ),
        compiler_params=pltpu.CompilerParams(
            # TODO(synk): on v7x, verify "parallel" actually shards the feature axis across
            # both TensorCores; switch to pltpu.CORE_PARALLEL on that axis if it does not.
            dimension_semantics=("parallel", "arbitrary"),
            vmem_limit_bytes=vmem_limit,
        ),
        cost_estimate=pl.CostEstimate(
            flops=num_rows * F,
            transcendentals=0,
            bytes_accessed=num_rows * F * itemsize + F * 4,
        ),
    )(slab)

    if k > 1:
        pooled_f32 = jnp.sum(pooled_f32.reshape(k, BH), axis=0, keepdims=True)
    pooled = pooled_f32.reshape(B, H).astype(encoder_outputs.dtype)

    # alpha = softmax(ones(Bh, S), dim=0) == constant 1/Bh (torch.ones default is f32);
    # data independent, so it is emitted in the wrapper rather than inside the kernel.
    alpha = jnp.full((Bh, S), 1.0 / Bh, dtype=jnp.float32)
    return pooled, alpha


if __name__ == "__main__":
    key = jax.random.PRNGKey(0)
    k1, k2 = jax.random.split(key)

    # Small shape consistent with the module: seq=8, batch=2, hidden=32.
    # (B*H = 64 < 128, so this exercises the lane-dense seq-fold path.)
    S, B, H = 8, 2, 32
    encoder_outputs = jax.random.normal(k1, (S, B, H), dtype=jnp.float32)
    hidden = jax.random.normal(k2, (B, H), dtype=jnp.float32)

    out, alpha = mean_pool(hidden, encoder_outputs)
    jax.block_until_ready((out, alpha))

    ref_out = jnp.mean(encoder_outputs, axis=0)
    ref_alpha = jax.nn.softmax(jnp.ones((B, S), jnp.float32), axis=0)
    np.testing.assert_allclose(np.asarray(out), np.asarray(ref_out), rtol=1e-6, atol=1e-6)
    np.testing.assert_allclose(np.asarray(alpha), np.asarray(ref_alpha), rtol=1e-6, atol=1e-6)

    # Second small check forcing the multi-chunk + masked-tail + (8, tf)-scratch path
    # (tiny block-size override keeps it fast while exercising the streaming code).
    S2, B2, H2 = 100, 2, 128
    enc2 = jax.random.normal(k1, (S2, B2, H2), dtype=jnp.float32)
    hid2 = jax.random.normal(k2, (B2, H2), dtype=jnp.float32)
    out2, _ = mean_pool(hid2, enc2, target_block_bytes=16 * 1024)
    jax.block_until_ready(out2)
    np.testing.assert_allclose(
        np.asarray(out2), np.asarray(jnp.mean(enc2, axis=0)), rtol=1e-5, atol=1e-5
    )

    print("KERNEL_OK")
</pallas_src>

<mosaic_0001>
module attributes {stable_mosaic.version = 11 : i64} {
  func.func @_meanpool_kernel(%arg0: i32, %arg1: i32, %arg2: memref<4x128xf32, #tpu.memory_space<vmem>>, %arg3: memref<1x128xf32, #tpu.memory_space<vmem>>, %arg4: memref<8x128xf32, #tpu.memory_space<vmem>>) attributes {dimension_semantics = [#tpu.dimension_semantics<parallel>, #tpu.dimension_semantics<arbitrary>], iteration_bounds = array<i64: 1, 1>, scalar_prefetch = 0 : i64, scratch_operands = 1 : i64, tpu.core_type = #tpu.core_type<tc>, window_params = [{transform_indices = @transform_0, window_bounds = array<i64: 4, 128>}, {transform_indices = @transform_1, window_bounds = array<i64: 1, 128>}]} {
    %c0_i32 = arith.constant 0 : i32
    %0 = arith.cmpi eq, %arg1, %c0_i32 : i32
    %1 = arith.extui %0 : i1 to i32
    %c0_i32_0 = arith.constant 0 : i32
    %2 = arith.cmpi ne, %1, %c0_i32_0 : i32
    scf.if %2 {
      %cst_8 = arith.constant 0.000000e+00 : f32
      %12 = vector.broadcast %cst_8 : f32 to vector<8x128xf32>
      %c0_9 = arith.constant 0 : index
      %c0_10 = arith.constant 0 : index
      %13 = vector.load %arg4[%c0_9, %c0_10] : memref<8x128xf32, #tpu.memory_space<vmem>>, vector<8x128xf32>
      tpu.vector_store %arg4[%c0_9, %c0_10], %12 {strides = array<i32>} : memref<8x128xf32, #tpu.memory_space<vmem>>, vector<8x128xf32>,
    } else {
    }
    %c0 = arith.constant 0 : index
    %c0_1 = arith.constant 0 : index
    %3 = vector.load %arg2[%c0, %c0_1] : memref<4x128xf32, #tpu.memory_space<vmem>>, vector<4x128xf32>
    %c0_2 = arith.constant 0 : index
    %c0_3 = arith.constant 0 : index
    %4 = vector.load %arg4[%c0_2, %c0_3] : memref<8x128xf32, #tpu.memory_space<vmem>>, vector<1x128xf32>
    %cst = arith.constant dense<0.000000e+00> : vector<128xf32>
    %5 = vector.multi_reduction <add>, %3, %cst [0] : vector<4x128xf32> to vector<128xf32>
    %6 = vector.shape_cast %5 : vector<128xf32> to vector<1x128xf32>
    %7 = arith.addf %4, %6 : vector<1x128xf32>
    %c0_4 = arith.constant 0 : index
    %c0_5 = arith.constant 0 : index
    %8 = vector.load %arg4[%c0_4, %c0_5] : memref<8x128xf32, #tpu.memory_space<vmem>>, vector<1x128xf32>
    tpu.vector_store %arg4[%c0_4, %c0_5], %7 {strides = array<i32>} : memref<8x128xf32, #tpu.memory_space<vmem>>, vector<1x128xf32>,
    %c0_i32_6 = arith.constant 0 : i32
    %9 = arith.cmpi eq, %arg1, %c0_i32_6 : i32
    %10 = arith.extui %9 : i1 to i32
    %c0_i32_7 = arith.constant 0 : i32
    %11 = arith.cmpi ne, %10, %c0_i32_7 : i32
    scf.if %11 {
      %c0_8 = arith.constant 0 : index
      %c0_9 = arith.constant 0 : index
      %12 = vector.load %arg4[%c0_8, %c0_9] : memref<8x128xf32, #tpu.memory_space<vmem>>, vector<8x128xf32>
      %cst_10 = arith.constant dense<0.000000e+00> : vector<128xf32>
      %13 = vector.multi_reduction <add>, %12, %cst_10 [0] : vector<8x128xf32> to vector<128xf32>
      %14 = vector.shape_cast %13 : vector<128xf32> to vector<1x128xf32>
      %cst_11 = arith.constant 1.250000e-01 : f32
      %15 = vector.broadcast %cst_11 : f32 to vector<1x128xf32>
      %16 = arith.mulf %14, %15 : vector<1x128xf32>
      %c0_12 = arith.constant 0 : index
      %c0_13 = arith.constant 0 : index
      %17 = vector.load %arg3[%c0_12, %c0_13] : memref<1x128xf32, #tpu.memory_space<vmem>>, vector<1x128xf32>
      tpu.vector_store %arg3[%c0_12, %c0_13], %16 {strides = array<i32>} : memref<1x128xf32, #tpu.memory_space<vmem>>, vector<1x128xf32>,
    } else {
    }
    return
  }
  func.func @transform_0(%arg0: i32, %arg1: i32) -> (i32, i32) {
    %c0_i32 = arith.constant 0 : i32
    return %arg1, %arg0 : i32, i32
  }
  func.func @transform_1(%arg0: i32, %arg1: i32) -> (i32, i32) {
    %c0_i32 = arith.constant 0 : i32
    %c0_i32_0 = arith.constant 0 : i32
    return %c0_i32, %arg0 : i32, i32
  }
}

</mosaic_0001>

<llo_original>
// kernel: tpu_custom_call.1
$region0: #{tpu_custom_call.1}
  #allocation0 [shape = 'u32[]', space=smem, size = 0x4, offset = 0x4, fixed_abs, tag = 'smem constant byte address 0x4 - core index']
  #allocation1 [shape = 'u32[144,128]{1,0:T(1,128)}', space=vmem, size = 0x12000, scoped, tag = 'internal scratch']
  #allocation2 [shape = 'f32[8,128]{1,0:T(8,128)}', space=vmem, size = 0x1000, scoped, tag = 'scratch operand']
  %s0 = inlined_call_operand.hbm [shape: f32[4,128], index: 0, kind: input, shape index: {}]
  %s1 = inlined_call_operand.hbm [shape: f32[1,128], index: 1, kind: output, shape index: {}]
  %s2 = sld [smem:[#allocation0]]
  $region26: #{tpu_custom_call.1} parent=0
    _
  %s4 = ssub.s32 1, %s2
  %s5 = scalar_select 0, %s4, %s2
  $region1: #{tpu_custom_call.1} parent=0
    #allocation3 [shape = 'u8[2048]{0}', space=vmem, size = 0x800, scoped, tag = 'input window, operand 0, single buffered']
    #allocation4 [shape = 's32[1]{0}', space=sflag, size = 0x4, scoped, tag = 'scoped memory for tpu_custom_call.1']
    #allocation5 [shape = 's32[1]{0}', space=sflag, size = 0x4, scoped, tag = 'scoped memory for tpu_custom_call.1']
    #allocation6 [shape = 'u8[512]{0}', space=vmem, size = 0x400, scoped, tag = 'output window, operand 0, single buffered']
    %6 = vsyncpa [#allocation4], 0
    %7 = vsyncpa [#allocation5], 0
    // Predicated region
    $region2: #{tpu_custom_call.1} parent=1 // pred_check
      _
    $region3: #{tpu_custom_call.1} parent=1 // pred_check_branch
      %9 = sbr.rel (0) target = $region5
    $region4: #{tpu_custom_call.1} parent=1 // pred_region
      %s11 = ssub.s32 64, 64
      %12 = vsyncadd [#allocation4], %s11
      %s14 = sshll.u32 [#allocation3], 4
      %s15 = int_to_ptr.vmem [resolvable:$true] %s14
      %17 = dma.hbm_to_vmem [thread:$0]  %s0, 64, %s15, [#allocation4]
    $region5: #{tpu_custom_call.1} parent=1 // pred_fallthru
      _
    // Predicated region
    $region6: #{tpu_custom_call.1} parent=1 // pred_check
      _
    $region7: #{tpu_custom_call.1} parent=1 // pred_check_branch
      %19 = sbr.rel (0) target = $region9
    $region8: #{tpu_custom_call.1} parent=1 // pred_region
      %20 = dma.done [#allocation4], 64
    $region9: #{tpu_custom_call.1} parent=1 // pred_fallthru
      _
    %p21 = scmp.eq.s32.totalorder 0, 0
    // Predicated region
    $region10: #{tpu_custom_call.1} parent=1 // pred_check
      %p22 = pneg %p21
    $region11: #{tpu_custom_call.1} parent=1 // pred_check_branch
      %24 = sbr.rel (%p22) target = $region13
    $region12: #{tpu_custom_call.1} parent=1 // pred_region
      %25 = vst [vmem:[#allocation2] sm:$0xff] 0.0
    $region13: #{tpu_custom_call.1} parent=1 // pred_fallthru
      _
    %v26 = vld [vmem:[#allocation3] sm:$0xf]
    %v27 = vld [vmem:[#allocation2] sm:$0x1]
    %vm28 = vcmask 1043456
    %v29 = vsel %vm28, %v26, 0.0
    %v30 = vrot.slane %v29, 4
    %v31 = vadd.f32 %v29, %v30
    %v32 = vrot.slane %v31, 2
    %v33 = vadd.f32 %v31, %v32
    %v34 = vrot.slane %v33, 1
    %v35 = vadd.f32 %v33, %v34
    %v36 = vadd.f32 %v27, %v35
    %37 = vst [vmem:[#allocation2] sm:$0x1] %v36
    // Predicated region
    $region14: #{tpu_custom_call.1} parent=1 // pred_check
      %p38 = pneg %p21
    $region15: #{tpu_custom_call.1} parent=1 // pred_check_branch
      %40 = sbr.rel (%p38) target = $region17
    $region16: #{tpu_custom_call.1} parent=1 // pred_region
      %v41 = vld [vmem:[#allocation2] sm:$0xff]
      %v42 = vrot.slane %v41, 4
      %v43 = vadd.f32 %v41, %v42
      %v44 = vrot.slane %v43, 2
      %v45 = vadd.f32 %v43, %v44
      %v46 = vrot.slane %v45, 1
      %v47 = vadd.f32 %v45, %v46
      %v48 = vmul.f32 %v47, 0.125
      %49 = vst [vmem:[#allocation6] sm:$0x1] %v48
    $region17: #{tpu_custom_call.1} parent=1 // pred_fallthru
      _
    // Predicated region
    $region18: #{tpu_custom_call.1} parent=1 // pred_check
      _
    $region19: #{tpu_custom_call.1} parent=1 // pred_check_branch
      %51 = sbr.rel (0) target = $region21
    $region20: #{tpu_custom_call.1} parent=1 // pred_region
      %s53 = ssub.s32 16, 16
      %54 = vsyncadd [#allocation5], %s53
      %s56 = sshll.u32 [#allocation6], 4
      %s57 = int_to_ptr.vmem [resolvable:$true] %s56
      %59 = dma.vmem_to_hbm [thread:$0]  %s57, 16, %s1, [#allocation5]
    $region21: #{tpu_custom_call.1} parent=1 // pred_fallthru
      _
    // Predicated region
    $region22: #{tpu_custom_call.1} parent=1 // pred_check
      _
    $region23: #{tpu_custom_call.1} parent=1 // pred_check_branch
      %61 = sbr.rel (0) target = $region25
    $region24: #{tpu_custom_call.1} parent=1 // pred_region
      %62 = dma.done [#allocation5], 16
    $region25: #{tpu_custom_call.1} parent=1 // pred_fallthru
      _
    %63 = vsyncpa [#allocation4], 1
    %64 = vsyncpa [#allocation5], 1

</llo_original>
